<compile_context>
chip_gen: v5e
topology: v5e:2x2
jax: 0.10.0
libtpu: 0.0.40
codegen_flags: <defaults>
</compile_context>

<pallas_src>
import jax
import jax.numpy as jnp
from jax.experimental import pallas as pl
from jax.experimental.pallas import tpu as pltpu


def _identity_kernel(x_ref, o_ref):
    # Pure elementwise pass-through (the "hot path" of the identity decoder).
    o_ref[...] = x_ref[...]


def _choose_layout(n, dtype_size):
    """Pick a lane-dense 2D layout and a MiB-scale row tile for n elements."""
    # Wide lanes for big inputs (fewer, larger DMA descriptors; unmasked vst);
    # narrow for tiny inputs so padding overhead stays negligible.
    if n >= 8 * 8192:
        cols = 8192
    elif n >= 8 * 1024:
        cols = 1024
    else:
        cols = 128
    chunk = 8 * cols                       # sublane x lane granularity
    padded = ((n + chunk - 1) // chunk) * chunk
    rows = padded // cols                  # multiple of 8 by construction

    # Largest row tile whose double-buffered working set (in + out, 2 buffers
    # each => 4 * tile_bytes) stays under ~8 MiB — safe on v5e's 16 MiB
    # default scoped VMEM and leaves ample headroom on v6e/v7x.
    max_tile_bytes = 2 * 1024 * 1024
    max_tile_rows = max(8, (max_tile_bytes // (cols * dtype_size)) // 8 * 8)
    tile_rows = min(rows, max_tile_rows)
    return rows, cols, padded, tile_rows


def _identity_pallas_2d(x2d, tile_rows):
    """Identity copy of a 2D array via a Pallas kernel, tiled over rows."""
    rows, cols = x2d.shape
    dtype_size = jnp.dtype(x2d.dtype).itemsize
    grid = (pl.cdiv(rows, tile_rows),)     # handles ragged trailing block
    return pl.pallas_call(
        _identity_kernel,
        out_shape=jax.ShapeDtypeStruct((rows, cols), x2d.dtype),
        grid_spec=pltpu.PrefetchScalarGridSpec(
            num_scalar_prefetch=0,
            grid=grid,
            in_specs=[pl.BlockSpec((tile_rows, cols), lambda i: (i, 0))],
            out_specs=pl.BlockSpec((tile_rows, cols), lambda i: (i, 0)),
        ),
        input_output_aliases={0: 0},       # identity: write into the input buffer
        cost_estimate=pl.CostEstimate(
            flops=0,
            transcendentals=0,
            bytes_accessed=2 * rows * cols * dtype_size,
        ),
        compiler_params=pltpu.CompilerParams(
            dimension_semantics=("parallel",),
        ),
    )(x2d)


def identity_decoder_forward(outputs, from_logits=True):
    """JAX/Pallas equivalent of IdentityDecoder.forward.

    `outputs`: any-rank jnp array (e.g. NCHW logits).  Returns a nested Python
    list with the same values/shape, matching torch.Tensor.tolist() semantics.
    `from_logits` is accepted but unused, exactly as in the PyTorch module.
    """
    orig_shape = outputs.shape
    orig_dtype = outputs.dtype
    flat = outputs.reshape(-1)
    n = flat.shape[0]
    if n == 0:
        return jnp.zeros(orig_shape, orig_dtype).tolist()

    rows, cols, padded, tile_rows = _choose_layout(
        n, jnp.dtype(orig_dtype).itemsize)

    # Pad only the tail (no full-size scatter-into-zeros copy); skip entirely
    # when already aligned.
    if padded != n:
        flat = jnp.pad(flat, (0, padded - n))
    x2d = flat.reshape(rows, cols)

    y2d = _identity_pallas_2d(x2d, tile_rows)
    y = y2d.reshape(-1)[:n].reshape(orig_shape)
    y = jax.block_until_ready(y)
    # torch's .tolist(): nested Python lists of Python scalars.
    return y.tolist()


if __name__ == "__main__":
    key = jax.random.PRNGKey(0)

    # Small NCHW "outputs" tensor consistent with a decoder's logits.
    x = jax.random.normal(key, (2, 4, 16, 16), dtype=jnp.float32)
    result = identity_decoder_forward(x, from_logits=True)
    ref = jax.block_until_ready(x).tolist()
    assert isinstance(result, list)
    assert result == ref, "Pallas identity decoder mismatch (aligned case)"

    # Ragged size that exercises the tail-padding / partial-tile path
    # (this shape tripped the old rows%64 assert style of failure).
    key2 = jax.random.PRNGKey(0)
    x2 = jax.random.normal(key2, (3, 5, 7), dtype=jnp.float32)
    result2 = identity_decoder_forward(x2, from_logits=True)
    ref2 = jax.block_until_ready(x2).tolist()
    assert result2 == ref2, "Pallas identity decoder mismatch (ragged case)"

    print("KERNEL_OK")
</pallas_src>

<mosaic_0001>
module attributes {stable_mosaic.version = 11 : i64} {
  func.func @_identity_kernel(%arg0: i32, %arg1: memref<16x128xf32, #tpu.memory_space<vmem>>, %arg2: memref<16x128xf32, #tpu.memory_space<vmem>>) attributes {dimension_semantics = [#tpu.dimension_semantics<parallel>], iteration_bounds = array<i64: 1>, scalar_prefetch = 0 : i64, scratch_operands = 0 : i64, tpu.core_type = #tpu.core_type<tc>, window_params = [{transform_indices = @transform_0, window_bounds = array<i64: 16, 128>}, {transform_indices = @transform_1, window_bounds = array<i64: 16, 128>}]} {
    %c0 = arith.constant 0 : index
    %c0_0 = arith.constant 0 : index
    %0 = vector.load %arg1[%c0, %c0_0] : memref<16x128xf32, #tpu.memory_space<vmem>>, vector<16x128xf32>
    %c0_1 = arith.constant 0 : index
    %c0_2 = arith.constant 0 : index
    %1 = vector.load %arg2[%c0_1, %c0_2] : memref<16x128xf32, #tpu.memory_space<vmem>>, vector<16x128xf32>
    tpu.vector_store %arg2[%c0_1, %c0_2], %0 {strides = array<i32>} : memref<16x128xf32, #tpu.memory_space<vmem>>, vector<16x128xf32>,
    return
  }
  func.func @transform_0(%arg0: i32) -> (i32, i32) {
    %c0_i32 = arith.constant 0 : i32
    %c0_i32_0 = arith.constant 0 : i32
    return %arg0, %c0_i32 : i32, i32
  }
  func.func @transform_1(%arg0: i32) -> (i32, i32) {
    %c0_i32 = arith.constant 0 : i32
    %c0_i32_0 = arith.constant 0 : i32
    return %arg0, %c0_i32 : i32, i32
  }
}

</mosaic_0001>

<llo_original>
// kernel: tpu_custom_call.1
$region0: #{tpu_custom_call.1}
  #allocation0 [shape = 'u32[]', space=smem, size = 0x4, offset = 0x4, fixed_abs, tag = 'smem constant byte address 0x4 - core index']
  #allocation1 [shape = 'u32[72,128]{1,0:T(1,128)}', space=vmem, size = 0x9000, scoped, tag = 'internal scratch']
  %s0 = inlined_call_operand.hbm [shape: f32[16,128], index: 0, kind: input, shape index: {}, may-alias: {0,1}]
  %s1 = inlined_call_operand.hbm [shape: f32[16,128], index: 1, kind: output, shape index: {}, may-alias: {0,1}]
  %s2 = sld [smem:[#allocation0]]
  $region18: #{tpu_custom_call.1} parent=0
    _
  %s4 = ssub.s32 1, %s2
  %s5 = scalar_select 0, %s4, %s2
  $region1: #{tpu_custom_call.1} parent=0
    #allocation2 [shape = 'u8[8192]{0}', space=vmem, size = 0x2000, scoped, tag = 'input window, operand 0, single buffered']
    #allocation3 [shape = 's32[1]{0}', space=sflag, size = 0x4, scoped, tag = 'scoped memory for tpu_custom_call.1']
    #allocation4 [shape = 's32[1]{0}', space=sflag, size = 0x4, scoped, tag = 'scoped memory for tpu_custom_call.1']
    #allocation5 [shape = 'u8[8192]{0}', space=vmem, size = 0x2000, scoped, tag = 'output window, operand 0, single buffered']
    %6 = vsyncpa [#allocation3], 0
    %7 = vsyncpa [#allocation4], 0
    // Predicated region
    $region2: #{tpu_custom_call.1} parent=1 // pred_check
      _
    $region3: #{tpu_custom_call.1} parent=1 // pred_check_branch
      %9 = sbr.rel (0) target = $region5
    $region4: #{tpu_custom_call.1} parent=1 // pred_region
      %11 = vsyncadd [#allocation3], 0
      %s12 = sshll.u32 %s0, 4
      %s13 = int_to_ptr.hbm [resolvable:$true] %s12
      %s14 = sshll.u32 [#allocation2], 4
      %s15 = int_to_ptr.vmem [resolvable:$true] %s14
      %20 = dma.hbm_to_vmem [thread:$0]  %s13, 256, %s15, [#allocation3], 128, 128, 8
    $region5: #{tpu_custom_call.1} parent=1 // pred_fallthru
      _
    // Predicated region
    $region6: #{tpu_custom_call.1} parent=1 // pred_check
      _
    $region7: #{tpu_custom_call.1} parent=1 // pred_check_branch
      %22 = sbr.rel (0) target = $region9
    $region8: #{tpu_custom_call.1} parent=1 // pred_region
      %24 = dma.done [#allocation3], 256
    $region9: #{tpu_custom_call.1} parent=1 // pred_fallthru
      _
    %v25 = vld [vmem:[#allocation2] sm:$0xff]
    %v26 = vld [vmem:[#allocation2 + $0x8] sm:$0xff]
    %27 = vst [vmem:[#allocation5] sm:$0xff] %v25
    %28 = vst [vmem:[#allocation5 + $0x8] sm:$0xff] %v26
    // Predicated region
    $region10: #{tpu_custom_call.1} parent=1 // pred_check
      _
    $region11: #{tpu_custom_call.1} parent=1 // pred_check_branch
      %30 = sbr.rel (0) target = $region13
    $region12: #{tpu_custom_call.1} parent=1 // pred_region
      %32 = vsyncadd [#allocation4], 0
      %s33 = sshll.u32 [#allocation5], 4
      %s34 = int_to_ptr.vmem [resolvable:$true] %s33
      %s35 = sshll.u32 %s1, 4
      %s36 = int_to_ptr.hbm [resolvable:$true] %s35
      %41 = dma.vmem_to_hbm [thread:$0]  %s34, 256, %s36, [#allocation4], 128, 128, 8
    $region13: #{tpu_custom_call.1} parent=1 // pred_fallthru
      _
    // Predicated region
    $region14: #{tpu_custom_call.1} parent=1 // pred_check
      _
    $region15: #{tpu_custom_call.1} parent=1 // pred_check_branch
      %43 = sbr.rel (0) target = $region17
    $region16: #{tpu_custom_call.1} parent=1 // pred_region
      %45 = dma.done [#allocation4], 256
    $region17: #{tpu_custom_call.1} parent=1 // pred_fallthru
      _
    %46 = vsyncpa [#allocation3], 1
    %47 = vsyncpa [#allocation4], 1

</llo_original>
